<compile_context>
chip_gen: v6e
topology: v6e:2x2x1
jax: 0.10.0
libtpu: 0.0.40
codegen_flags: <defaults>
</compile_context>

<pallas_src>
import functools

import jax
import jax.numpy as jnp
from jax.experimental import pallas as pl
from jax.experimental.pallas import tpu as pltpu

LANE = 128  # vreg lane width (f32)


def _round_up(n, m):
    return (n + m - 1) // m * m


def deepnet_kernel(x_ref, w1_ref, b1_ref, w2_ref, b2_ref, out_ref):
    # Two MXU matmuls (bf16 in, f32 acc), VPU relu, EUP exp, XLU row-reduce.
    x = x_ref[...]                                                   # (tb, 32) bf16
    h = jnp.dot(x, w1_ref[...],
                preferred_element_type=jnp.float32) + b1_ref[...]    # (tb, H_PAD) f32
    h = jnp.maximum(h, 0.0)                                          # ReLU
    logits = jnp.dot(h.astype(jnp.bfloat16), w2_ref[...],
                     preferred_element_type=jnp.float32) + b2_ref[...]  # (tb, A_PAD) f32
    # Numerically stable softmax along the (padded) action axis.
    # Padded actions carry a -1e30 bias -> exp underflows to exactly 0.
    m = jnp.max(logits, axis=-1, keepdims=True)
    e = jnp.exp(logits - m)
    denom = jnp.sum(e, axis=-1, keepdims=True)
    out_ref[...] = e / denom                                         # exact: rows sum to 1


def pad_params(w1, b1, w2, b2):
    """One-time prep: cast matmul weights to bf16, pad hidden/action dims to 128."""
    n_states, hidden = w1.shape
    n_actions = w2.shape[1]
    H = _round_up(hidden, LANE)      # 64  -> 128
    A = _round_up(n_actions, LANE)   # 8   -> 128
    w1p = jnp.zeros((n_states, H), jnp.bfloat16).at[:, :hidden].set(
        w1.astype(jnp.bfloat16))                                     # (32, 128)
    b1p = jnp.zeros((1, H), jnp.float32).at[:, :hidden].set(b1)      # (1, 128) f32
    w2p = jnp.zeros((H, A), jnp.bfloat16).at[:hidden, :n_actions].set(
        w2.astype(jnp.bfloat16))                                     # (128, 128)
    # Huge negative bias on padded action lanes -> softmax prob exactly 0 there.
    b2p = jnp.full((1, A), -1e30, jnp.float32).at[:, :n_actions].set(b2)
    return w1p, b1p, w2p, b2p


@functools.partial(jax.jit, static_argnames=("n_states", "n_actions", "tb"))
def deepnet_forward(x, w1p, b1p, w2p, b2p, *, n_states, n_actions, tb=None):
    B = x.shape[0]
    S = w1p.shape[0]          # unpadded state dim (32)
    H_PAD = w1p.shape[1]
    A_PAD = w2p.shape[1]

    # Tile choice: single grid step up to 1024 rows (per-step overhead dominates
    # at these sizes). On v7x, pass an explicit tb = Bp // 2 (even #tiles) so the
    # "parallel" batch axis splits across the 2 TensorCores.
    if tb is None:
        tb = min(_round_up(max(B, 8), 8), 1024)
    Bp = _round_up(max(B, 8), tb)
    num_tiles = Bp // tb

    xb = x.astype(jnp.bfloat16)
    if Bp != B:
        xb = jnp.pad(xb, ((0, Bp - B), (0, 0)))   # batch pad only; rows independent

    cost = pl.CostEstimate(
        flops=2 * Bp * (S * H_PAD + H_PAD * A_PAD),
        transcendentals=Bp * A_PAD,                       # exp in the softmax
        bytes_accessed=(2 * (Bp * S + S * H_PAD + H_PAD * A_PAD)   # bf16 streams
                        + 4 * (H_PAD + A_PAD + Bp * A_PAD)),        # f32 biases + out
    )

    out_pad = pl.pallas_call(
        deepnet_kernel,
        out_shape=jax.ShapeDtypeStruct((Bp, A_PAD), jnp.float32),
        grid=(num_tiles,),
        in_specs=[
            pl.BlockSpec((tb, S), lambda i: (i, 0)),          # x: tiled over batch, unpadded feats
            pl.BlockSpec((S, H_PAD), lambda i: (0, 0)),       # w1: VMEM-resident
            pl.BlockSpec((1, H_PAD), lambda i: (0, 0)),       # b1: VMEM-resident
            pl.BlockSpec((H_PAD, A_PAD), lambda i: (0, 0)),   # w2: VMEM-resident
            pl.BlockSpec((1, A_PAD), lambda i: (0, 0)),       # b2: VMEM-resident
        ],
        out_specs=pl.BlockSpec((tb, A_PAD), lambda i: (i, 0)),  # lane-dense store
        compiler_params=pltpu.CompilerParams(
            dimension_semantics=("parallel",),
        ),
        cost_estimate=cost,
    )(xb, w1p, b1p, w2p, b2p)

    # Strip batch + action padding.
    return out_pad[:B, :n_actions]


def init_params(key, n_states, hidden, n_actions):
    # PyTorch-style Linear init: U(-1/sqrt(fan_in), +1/sqrt(fan_in)),
    # weights stored (in_features, out_features) so the kernel does x @ W.
    k1, k2, k3, k4 = jax.random.split(key, 4)
    lim1 = 1.0 / jnp.sqrt(jnp.float32(n_states))
    lim2 = 1.0 / jnp.sqrt(jnp.float32(hidden))
    w1 = jax.random.uniform(k1, (n_states, hidden), jnp.float32, -lim1, lim1)
    b1 = jax.random.uniform(k2, (1, hidden), jnp.float32, -lim1, lim1)
    w2 = jax.random.uniform(k3, (hidden, n_actions), jnp.float32, -lim2, lim2)
    b2 = jax.random.uniform(k4, (1, n_actions), jnp.float32, -lim2, lim2)
    return w1, b1, w2, b2


if __name__ == "__main__":
    N_STATES, HIDDEN, N_ACTIONS = 32, 64, 8
    BATCH = 256

    key = jax.random.PRNGKey(0)
    kx, kp = jax.random.split(key)
    x = jax.random.normal(kx, (BATCH, N_STATES), jnp.float32)
    w1, b1, w2, b2 = init_params(kp, N_STATES, HIDDEN, N_ACTIONS)
    w1p, b1p, w2p, b2p = pad_params(w1, b1, w2, b2)

    out = jax.block_until_ready(
        deepnet_forward(x, w1p, b1p, w2p, b2p,
                        n_states=N_STATES, n_actions=N_ACTIONS))

    # sanity check against pure-JAX f32 reference (unpadded params)
    h_ref = jnp.maximum(x @ w1 + b1, 0.0)
    ref = jax.nn.softmax(h_ref @ w2 + b2, axis=-1)
    assert out.shape == (BATCH, N_ACTIONS)
    assert jnp.allclose(out, ref, atol=4e-3, rtol=4e-3)          # bf16 matmul inputs
    assert jnp.allclose(jnp.sum(out, axis=-1), 1.0, atol=1e-3)   # exact normalization

    # tiny-batch per-step DQN action-select path (pads only to 8 rows, grid=(1,))
    out_small = jax.block_until_ready(
        deepnet_forward(x[:2], w1p, b1p, w2p, b2p,
                        n_states=N_STATES, n_actions=N_ACTIONS))
    assert out_small.shape == (2, N_ACTIONS)
    assert jnp.allclose(out_small, ref[:2], atol=4e-3, rtol=4e-3)

    print("KERNEL_OK")
</pallas_src>

<mosaic_0001>
module attributes {stable_mosaic.version = 11 : i64} {
  func.func @deepnet_kernel(%arg0: i32, %arg1: memref<256x32xbf16, #tpu.memory_space<vmem>>, %arg2: memref<32x128xbf16, #tpu.memory_space<vmem>>, %arg3: memref<1x128xf32, #tpu.memory_space<vmem>>, %arg4: memref<128x128xbf16, #tpu.memory_space<vmem>>, %arg5: memref<1x128xf32, #tpu.memory_space<vmem>>, %arg6: memref<256x128xf32, #tpu.memory_space<vmem>>) attributes {dimension_semantics = [#tpu.dimension_semantics<parallel>], iteration_bounds = array<i64: 1>, scalar_prefetch = 0 : i64, scratch_operands = 0 : i64, tpu.core_type = #tpu.core_type<tc>, window_params = [{transform_indices = @transform_0, window_bounds = array<i64: 256, 32>}, {pipeline_mode = #tpu.pipeline_mode<synchronous>, transform_indices = @transform_1, window_bounds = array<i64: 32, 128>}, {pipeline_mode = #tpu.pipeline_mode<synchronous>, transform_indices = @transform_2, window_bounds = array<i64: 1, 128>}, {pipeline_mode = #tpu.pipeline_mode<synchronous>, transform_indices = @transform_3, window_bounds = array<i64: 128, 128>}, {pipeline_mode = #tpu.pipeline_mode<synchronous>, transform_indices = @transform_4, window_bounds = array<i64: 1, 128>}, {transform_indices = @transform_5, window_bounds = array<i64: 256, 128>}]} {
    %c0 = arith.constant 0 : index
    %c0_0 = arith.constant 0 : index
    %0 = vector.load %arg1[%c0, %c0_0] : memref<256x32xbf16, #tpu.memory_space<vmem>>, vector<256x32xbf16>
    %c0_1 = arith.constant 0 : index
    %c0_2 = arith.constant 0 : index
    %1 = vector.load %arg2[%c0_1, %c0_2] : memref<32x128xbf16, #tpu.memory_space<vmem>>, vector<32x128xbf16>
    %cst = arith.constant dense<0.000000e+00> : vector<256x128xf32>
    %2 = tpu.matmul %0, %1, %cst {dimension_numbers = #tpu.dot_dimension_numbers<[1], [0], [0], [1], [0, 0, 1, 1], [], []>} : vector<256x32xbf16>, vector<32x128xbf16>, vector<256x128xf32> -> vector<256x128xf32>
    %c0_3 = arith.constant 0 : index
    %c0_4 = arith.constant 0 : index
    %3 = vector.load %arg3[%c0_3, %c0_4] : memref<1x128xf32, #tpu.memory_space<vmem>>, vector<1x128xf32>
    %4 = vector.broadcast %3 : vector<1x128xf32> to vector<256x128xf32>
    %5 = arith.addf %2, %4 : vector<256x128xf32>
    %cst_5 = arith.constant 0.000000e+00 : f32
    %6 = vector.broadcast %cst_5 : f32 to vector<256x128xf32>
    %7 = arith.maximumf %5, %6 : vector<256x128xf32>
    %8 = arith.truncf %7 : vector<256x128xf32> to vector<256x128xbf16>
    %c0_6 = arith.constant 0 : index
    %c0_7 = arith.constant 0 : index
    %9 = vector.load %arg4[%c0_6, %c0_7] : memref<128x128xbf16, #tpu.memory_space<vmem>>, vector<128x128xbf16>
    %cst_8 = arith.constant dense<0.000000e+00> : vector<256x128xf32>
    %10 = tpu.matmul %8, %9, %cst_8 {dimension_numbers = #tpu.dot_dimension_numbers<[1], [0], [0], [1], [0, 0, 1, 1], [], []>} : vector<256x128xbf16>, vector<128x128xbf16>, vector<256x128xf32> -> vector<256x128xf32>
    %c0_9 = arith.constant 0 : index
    %c0_10 = arith.constant 0 : index
    %11 = vector.load %arg5[%c0_9, %c0_10] : memref<1x128xf32, #tpu.memory_space<vmem>>, vector<1x128xf32>
    %12 = vector.broadcast %11 : vector<1x128xf32> to vector<256x128xf32>
    %13 = arith.addf %10, %12 : vector<256x128xf32>
    %cst_11 = arith.constant dense<0xFF800000> : vector<256xf32>
    %14 = vector.multi_reduction <maximumf>, %13, %cst_11 [1] : vector<256x128xf32> to vector<256xf32>
    %15 = vector.shape_cast %14 : vector<256xf32> to vector<256x1xf32>
    %16 = vector.broadcast %15 : vector<256x1xf32> to vector<256x128xf32>
    %17 = arith.subf %13, %16 : vector<256x128xf32>
    %18 = math.exp %17 : vector<256x128xf32>
    %cst_12 = arith.constant dense<0.000000e+00> : vector<256xf32>
    %19 = vector.multi_reduction <add>, %18, %cst_12 [1] : vector<256x128xf32> to vector<256xf32>
    %20 = vector.shape_cast %19 : vector<256xf32> to vector<256x1xf32>
    %21 = vector.broadcast %20 : vector<256x1xf32> to vector<256x128xf32>
    %22 = arith.divf %18, %21 : vector<256x128xf32>
    %c0_13 = arith.constant 0 : index
    %c0_14 = arith.constant 0 : index
    %23 = vector.load %arg6[%c0_13, %c0_14] : memref<256x128xf32, #tpu.memory_space<vmem>>, vector<256x128xf32>
    tpu.vector_store %arg6[%c0_13, %c0_14], %22 {strides = array<i32>} : memref<256x128xf32, #tpu.memory_space<vmem>>, vector<256x128xf32>,
    return
  }
  func.func @transform_0(%arg0: i32) -> (i32, i32) {
    %c0_i32 = arith.constant 0 : i32
    %c0_i32_0 = arith.constant 0 : i32
    return %arg0, %c0_i32 : i32, i32
  }
  func.func @transform_1(%arg0: i32) -> (i32, i32) {
    %c0_i32 = arith.constant 0 : i32
    %c0_i32_0 = arith.constant 0 : i32
    %c0_i32_1 = arith.constant 0 : i32
    return %c0_i32, %c0_i32_0 : i32, i32
  }
  func.func @transform_2(%arg0: i32) -> (i32, i32) {
    %c0_i32 = arith.constant 0 : i32
    %c0_i32_0 = arith.constant 0 : i32
    %c0_i32_1 = arith.constant 0 : i32
    return %c0_i32, %c0_i32_0 : i32, i32
  }
  func.func @transform_3(%arg0: i32) -> (i32, i32) {
    %c0_i32 = arith.constant 0 : i32
    %c0_i32_0 = arith.constant 0 : i32
    %c0_i32_1 = arith.constant 0 : i32
    return %c0_i32, %c0_i32_0 : i32, i32
  }
  func.func @transform_4(%arg0: i32) -> (i32, i32) {
    %c0_i32 = arith.constant 0 : i32
    %c0_i32_0 = arith.constant 0 : i32
    %c0_i32_1 = arith.constant 0 : i32
    return %c0_i32, %c0_i32_0 : i32, i32
  }
  func.func @transform_5(%arg0: i32) -> (i32, i32) {
    %c0_i32 = arith.constant 0 : i32
    %c0_i32_0 = arith.constant 0 : i32
    return %arg0, %c0_i32 : i32, i32
  }
}

</mosaic_0001>

<llo_original>
// kernel: deepnet_forward.1
$region0: #{deepnet_forward.1}
  #allocation0 [shape = 'u32[]', space=smem, size = 0x4, offset = 0x4, fixed_abs, tag = 'smem constant byte address 0x4 - core index']
  #allocation1 [shape = 'u32[144,128]{1,0:T(1,128)}', space=vmem, size = 0x12000, scoped, tag = 'internal scratch']
  %s0 = inlined_call_operand.vmem [shape: bf16[256,32], index: 0, kind: input, shape index: {}]
  %s1 = inlined_call_operand.vmem [shape: bf16[32,128], index: 1, kind: input, shape index: {}]
  %s2 = inlined_call_operand.vmem [shape: f32[1,128], index: 2, kind: input, shape index: {}]
  %s3 = inlined_call_operand.vmem [shape: bf16[128,128], index: 3, kind: input, shape index: {}]
  %s4 = inlined_call_operand.vmem [shape: f32[1,128], index: 4, kind: input, shape index: {}]
  %s5 = inlined_call_operand.vmem [shape: f32[256,128], index: 5, kind: output, shape index: {}]
  %s6 = sld [smem:[#allocation0]]
  $region30: #{deepnet_forward.1} parent=0
    _
  %s8 = ssub.s32 1, %s6
  %s9 = scalar_select 0, %s8, %s6
  // Predicated region
  $region2: #{deepnet_forward.1} parent=0 // pred_check
    _
  $region3: #{deepnet_forward.1} parent=0 // pred_check_branch
    %11 = sbr.rel (0) target = $region5
  $region4: #{deepnet_forward.1} parent=0 // pred_region
    _
  $region5: #{deepnet_forward.1} parent=0 // pred_fallthru
    _
  // Predicated region
  $region6: #{deepnet_forward.1} parent=0 // pred_check
    _
  $region7: #{deepnet_forward.1} parent=0 // pred_check_branch
    %13 = sbr.rel (0) target = $region9
  $region8: #{deepnet_forward.1} parent=0 // pred_region
    _
  $region9: #{deepnet_forward.1} parent=0 // pred_fallthru
    _
  // Predicated region
  $region10: #{deepnet_forward.1} parent=0 // pred_check
    _
  $region11: #{deepnet_forward.1} parent=0 // pred_check_branch
    %15 = sbr.rel (0) target = $region13
  $region12: #{deepnet_forward.1} parent=0 // pred_region
    _
  $region13: #{deepnet_forward.1} parent=0 // pred_fallthru
    _
  // Predicated region
  $region14: #{deepnet_forward.1} parent=0 // pred_check
    _
  $region15: #{deepnet_forward.1} parent=0 // pred_check_branch
    %17 = sbr.rel (0) target = $region17
  $region16: #{deepnet_forward.1} parent=0 // pred_region
    _
  $region17: #{deepnet_forward.1} parent=0 // pred_fallthru
    _
  // Predicated region
  $region18: #{deepnet_forward.1} parent=0 // pred_check
    _
  $region19: #{deepnet_forward.1} parent=0 // pred_check_branch
    %19 = sbr.rel (0) target = $region21
  $region20: #{deepnet_forward.1} parent=0 // pred_region
    _
  $region21: #{deepnet_forward.1} parent=0 // pred_fallthru
    _
  %v21 = vld [vmem:[%s0] sm:$0xf]
  %v22 = vld [vmem:[%s0 + $0x4] sm:$0xf]
  %v23 = vld [vmem:[%s0 + $0x8] sm:$0xf]
  %v24 = vld [vmem:[%s0 + $0xc] sm:$0xf]
  %v25 = vld [vmem:[%s0 + $0x10] sm:$0xf]
  %v26 = vld [vmem:[%s0 + $0x14] sm:$0xf]
  %v27 = vld [vmem:[%s0 + $0x18] sm:$0xf]
  %v28 = vld [vmem:[%s0 + $0x1c] sm:$0xf]
  %v29 = vld [vmem:[%s0 + $0x20] sm:$0xf]
  %v30 = vld [vmem:[%s0 + $0x24] sm:$0xf]
  %v31 = vld [vmem:[%s0 + $0x28] sm:$0xf]
  %v32 = vld [vmem:[%s0 + $0x2c] sm:$0xf]
  %v33 = vld [vmem:[%s0 + $0x30] sm:$0xf]
  %v34 = vld [vmem:[%s0 + $0x34] sm:$0xf]
  %v35 = vld [vmem:[%s0 + $0x38] sm:$0xf]
  %v36 = vld [vmem:[%s0 + $0x3c] sm:$0xf]
  %v37 = vld [vmem:[%s0 + $0x40] sm:$0xf]
  %v38 = vld [vmem:[%s0 + $0x44] sm:$0xf]
  %v39 = vld [vmem:[%s0 + $0x48] sm:$0xf]
  %v40 = vld [vmem:[%s0 + $0x4c] sm:$0xf]
  %v41 = vld [vmem:[%s0 + $0x50] sm:$0xf]
  %v42 = vld [vmem:[%s0 + $0x54] sm:$0xf]
  %v43 = vld [vmem:[%s0 + $0x58] sm:$0xf]
  %v44 = vld [vmem:[%s0 + $0x5c] sm:$0xf]
  %v45 = vld [vmem:[%s0 + $0x60] sm:$0xf]
  %v46 = vld [vmem:[%s0 + $0x64] sm:$0xf]
  %v47 = vld [vmem:[%s0 + $0x68] sm:$0xf]
  %v48 = vld [vmem:[%s0 + $0x6c] sm:$0xf]
  %v49 = vld [vmem:[%s0 + $0x70] sm:$0xf]
  %v50 = vld [vmem:[%s0 + $0x74] sm:$0xf]
  %v51 = vld [vmem:[%s0 + $0x78] sm:$0xf]
  %v52 = vld [vmem:[%s0 + $0x7c] sm:$0xf]
  %v53 = vld [vmem:[%s1] sm:$0xf]
  %v54 = vld [vmem:[%s1 + $0x4] sm:$0xf]
  %v55 = vld [vmem:[%s1 + $0x8] sm:$0xf]
  %v56 = vld [vmem:[%s1 + $0xc] sm:$0xf]
  %v57 = vld [vmem:[%s2] sm:$0x1]
  %v59 = vlaneseq
  %v60 = vshrl.u32 %v59, 7
  %v61 = vsub.s32 0, %v60
  %v62 = vrot.slane %v57, %v61
  %v96 = vunpack.c.l.b16 %v21
  %v97 = vunpack.c.l.b16 %v22
  %v98 = vunpack.c.l.b16 %v23
  %v99 = vunpack.c.l.b16 %v24
  %v100 = vunpack.c.l.b16 %v25
  %v101 = vunpack.c.l.b16 %v26
  %v102 = vunpack.c.l.b16 %v27
  %v103 = vunpack.c.l.b16 %v28
  %v104 = vunpack.c.l.b16 %v29
  %v105 = vunpack.c.l.b16 %v30
  %v106 = vunpack.c.l.b16 %v31
  %v107 = vunpack.c.l.b16 %v32
  %v108 = vunpack.c.l.b16 %v33
  %v109 = vunpack.c.l.b16 %v34
  %v110 = vunpack.c.l.b16 %v35
  %v111 = vunpack.c.l.b16 %v36
  %v112 = vunpack.c.l.b16 %v37
  %v113 = vunpack.c.l.b16 %v38
  %v114 = vunpack.c.l.b16 %v39
  %v115 = vunpack.c.l.b16 %v40
  %v116 = vunpack.c.l.b16 %v41
  %v117 = vunpack.c.l.b16 %v42
  %v118 = vunpack.c.l.b16 %v43
  %v119 = vunpack.c.l.b16 %v44
  %v120 = vunpack.c.l.b16 %v45
  %v121 = vunpack.c.l.b16 %v46
  %v122 = vunpack.c.l.b16 %v47
  %v123 = vunpack.c.l.b16 %v48
  %v124 = vunpack.c.l.b16 %v49
  %v125 = vunpack.c.l.b16 %v50
  %v126 = vunpack.c.l.b16 %v51
  %v127 = vunpack.c.l.b16 %v52
  %v128 = vpack.c.b16 %v97, %v96
  %v129 = vpack.c.b16 %v99, %v98
  %v130 = vpack.c.b16 %v101, %v100
  %v131 = vpack.c.b16 %v103, %v102
  %v132 = vpack.c.b16 %v105, %v104
  %v133 = vpack.c.b16 %v107, %v106
  %v134 = vpack.c.b16 %v109, %v108
  %v135 = vpack.c.b16 %v111, %v110
  %v136 = vpack.c.b16 %v113, %v112
  %v137 = vpack.c.b16 %v115, %v114
  %v138 = vpack.c.b16 %v117, %v116
  %v139 = vpack.c.b16 %v119, %v118
  %v140 = vpack.c.b16 %v121, %v120
  %v141 = vpack.c.b16 %v123, %v122
  %v142 = vpack.c.b16 %v125, %v124
  %v143 = vpack.c.b16 %v127, %v126
  %v148 = vunpack.c.l.b16 %v53
  %v149 = vunpack.c.l.b16 %v54
  %v150 = vunpack.c.l.b16 %v55
  %v151 = vunpack.c.l.b16 %v56
  %v152 = vpack.c.b16 %v149, %v148
  %v153 = vpack.c.b16 %v151, %v150
  %vm156 = vcmask 261120
  %v158 = vsel %vm156, %v128, 0
  %v161 = vsel %vm156, %v129, 0
  %v164 = vsel %vm156, %v130, 0
  %v167 = vsel %vm156, %v131, 0
  %v170 = vsel %vm156, %v132, 0
  %v173 = vsel %vm156, %v133, 0
  %v176 = vsel %vm156, %v134, 0
  %v179 = vsel %vm156, %v135, 0
  %v182 = vsel %vm156, %v136, 0
  %v185 = vsel %vm156, %v137, 0
  %v188 = vsel %vm156, %v138, 0
  %v191 = vsel %vm156, %v139, 0
  %v194 = vsel %vm156, %v140, 0
  %v197 = vsel %vm156, %v141, 0
  %v200 = vsel %vm156, %v142, 0
  %v203 = vsel %vm156, %v143, 0
  %205 = vmatprep.subr.bf16.mxu0 0
  %206 = vmatpush1.bf16.msra.mxu0 0
  %207 = vmatprep.subr.bf16.mxu0 0
  %208 = vmatpush1.bf16.msra.mxu0 0
  %209 = vmatprep.subr.bf16.mxu0 0
  %210 = vmatpush1.bf16.msra.mxu0 0
  %211 = vmatprep.subr.bf16.mxu0 0
  %212 = vmatpush1.bf16.msra.mxu0 0
  %213 = vmatprep.subr.bf16.mxu0 0
  %214 = vmatpush1.bf16.msra.mxu0 0
  %215 = vmatprep.subr.bf16.mxu0 0
  %216 = vmatpush1.bf16.msra.mxu0 0
  %217 = vmatprep.subr.bf16.mxu0 0
  %218 = vmatpush1.bf16.msra.mxu0 %v153
  %219 = vmatprep.subr.bf16.mxu0 0
  %220 = vmatpush1.bf16.msra.mxu0 %v152
  %221 = vmatprep.subr.bf16.mxu0 0
  %222 = vmatpush2.bf16.msra.mxu0 0
  %223 = vmatprep.subr.bf16.mxu0 0
  %224 = vmatpush2.bf16.msra.mxu0 0
  %225 = vmatprep.subr.bf16.mxu0 0
  %226 = vmatpush2.bf16.msra.mxu0 0
  %227 = vmatprep.subr.bf16.mxu0 0
  %228 = vmatpush2.bf16.msra.mxu0 0
  %229 = vmatprep.subr.bf16.mxu0 0
  %230 = vmatpush2.bf16.msra.mxu0 0
  %231 = vmatprep.subr.bf16.mxu0 0
  %232 = vmatpush2.bf16.msra.mxu0 0
  %233 = vmatprep.subr.bf16.mxu0 0
  %234 = vmatpush2.bf16.msra.mxu0 0
  %235 = vmatprep.subr.bf16.mxu0 0
  %236 = vmatpush2.bf16.msra.mxu0 0
  %237 = vmatprep.mubr.bf16.mxu0 0
  %238 = vmatmul.mubr.bf16.gmra.mxu0 %v158
  %v239 = vpop.f32.mrf.mxu0
  %v240 = vadd.f32 %v62, %v239
  %v241 = vpop.f32.mrf.mxu0
  %v242 = vpop.f32.mrf.mxu0
  %v243 = vadd.f32 %v62, %v242
  %v244 = vpop.f32.mrf.mxu0
  %245 = vmatprep.mubr.bf16.mxu0 0
  %246 = vmatmul.mubr.bf16.gmra.mxu0 %v161
  %v247 = vpop.f32.mrf.mxu0
  %v248 = vadd.f32 %v62, %v247
  %v249 = vpop.f32.mrf.mxu0
  %v250 = vpop.f32.mrf.mxu0
  %v251 = vadd.f32 %v62, %v250
  %v252 = vpop.f32.mrf.mxu0
  %253 = vmatprep.mubr.bf16.mxu0 0
  %254 = vmatmul.mubr.bf16.gmra.mxu0 %v164
  %v255 = vpop.f32.mrf.mxu0
  %v256 = vadd.f32 %v62, %v255
  %v257 = vpop.f32.mrf.mxu0
  %v258 = vpop.f32.mrf.mxu0
  %v259 = vadd.f32 %v62, %v258
  %v260 = vpop.f32.mrf.mxu0
  %261 = vmatprep.mubr.bf16.mxu0 0
  %262 = vmatmul.mubr.bf16.gmra.mxu0 %v167
  %v263 = vpop.f32.mrf.mxu0
  %v264 = vadd.f32 %v62, %v263
  %v265 = vpop.f32.mrf.mxu0
  %v266 = vpop.f32.mrf.mxu0
  %v267 = vadd.f32 %v62, %v266
  %v268 = vpop.f32.mrf.mxu0
  %269 = vmatprep.mubr.bf16.mxu0 0
  %270 = vmatmul.mubr.bf16.gmra.mxu0 %v170
  %v271 = vpop.f32.mrf.mxu0
  %v272 = vadd.f32 %v62, %v271
  %v273 = vpop.f32.mrf.mxu0
  %v274 = vpop.f32.mrf.mxu0
  %v275 = vadd.f32 %v62, %v274
  %v276 = vpop.f32.mrf.mxu0
  %277 = vmatprep.mubr.bf16.mxu0 0
  %278 = vmatmul.mubr.bf16.gmra.mxu0 %v173
  %v279 = vpop.f32.mrf.mxu0
  %v280 = vadd.f32 %v62, %v279
  %v281 = vpop.f32.mrf.mxu0
  %v282 = vpop.f32.mrf.mxu0
  %v283 = vadd.f32 %v62, %v282
  %v284 = vpop.f32.mrf.mxu0
  %285 = vmatprep.mubr.bf16.mxu0 0
  %286 = vmatmul.mubr.bf16.gmra.mxu0 %v176
  %v287 = vpop.f32.mrf.mxu0
  %v288 = vadd.f32 %v62, %v287
  %v289 = vpop.f32.mrf.mxu0
  %v290 = vpop.f32.mrf.mxu0
  %v291 = vadd.f32 %v62, %v290
  %v292 = vpop.f32.mrf.mxu0
  %293 = vmatprep.mubr.bf16.mxu0 0
  %294 = vmatmul.mubr.bf16.gmra.mxu0 %v179
  %v295 = vpop.f32.mrf.mxu0
  %v296 = vadd.f32 %v62, %v295
  %v297 = vpop.f32.mrf.mxu0
  %v298 = vpop.f32.mrf.mxu0
  %v299 = vadd.f32 %v62, %v298
  %v300 = vpop.f32.mrf.mxu0
  %301 = vmatprep.mubr.bf16.mxu0 0
  %302 = vmatmul.mubr.bf16.gmra.mxu0 %v182
  %v303 = vpop.f32.mrf.mxu0
  %v304 = vadd.f32 %v62, %v303
  %v305 = vpop.f32.mrf.mxu0
  %v306 = vpop.f32.mrf.mxu0
  %v307 = vadd.f32 %v62, %v306
  %v308 = vpop.f32.mrf.mxu0
  %309 = vmatprep.mubr.bf16.mxu0 0
  %310 = vmatmul.mubr.bf16.gmra.mxu0 %v185
  %v311 = vpop.f32.mrf.mxu0
  %v312 = vadd.f32 %v62, %v311
  %v313 = vpop.f32.mrf.mxu0
  %v314 = vpop.f32.mrf.mxu0
  %v315 = vadd.f32 %v62, %v314
  %v316 = vpop.f32.mrf.mxu0
  %317 = vmatprep.mubr.bf16.mxu0 0
  %318 = vmatmul.mubr.bf16.gmra.mxu0 %v188
  %v319 = vpop.f32.mrf.mxu0
  %v320 = vadd.f32 %v62, %v319
  %v321 = vpop.f32.mrf.mxu0
  %v322 = vpop.f32.mrf.mxu0
  %v323 = vadd.f32 %v62, %v322
  %v324 = vpop.f32.mrf.mxu0
  %325 = vmatprep.mubr.bf16.mxu0 0
  %326 = vmatmul.mubr.bf16.gmra.mxu0 %v191
  %v327 = vpop.f32.mrf.mxu0
  %v328 = vadd.f32 %v62, %v327
  %v329 = vpop.f32.mrf.mxu0
  %v330 = vpop.f32.mrf.mxu0
  %v331 = vadd.f32 %v62, %v330
  %v332 = vpop.f32.mrf.mxu0
  %333 = vmatprep.mubr.bf16.mxu0 0
  %334 = vmatmul.mubr.bf16.gmra.mxu0 %v194
  %v335 = vpop.f32.mrf.mxu0
  %v336 = vadd.f32 %v62, %v335
  %v337 = vpop.f32.mrf.mxu0
  %v338 = vpop.f32.mrf.mxu0
  %v339 = vadd.f32 %v62, %v338
  %v340 = vpop.f32.mrf.mxu0
  %341 = vmatprep.mubr.bf16.mxu0 0
  %342 = vmatmul.mubr.bf16.gmra.mxu0 %v197
  %v343 = vpop.f32.mrf.mxu0
  %v344 = vadd.f32 %v62, %v343
  %v345 = vpop.f32.mrf.mxu0
  %v346 = vpop.f32.mrf.mxu0
  %v347 = vadd.f32 %v62, %v346
  %v348 = vpop.f32.mrf.mxu0
  %349 = vmatprep.mubr.bf16.mxu0 0
  %350 = vmatmul.mubr.bf16.gmra.mxu0 %v200
  %v351 = vpop.f32.mrf.mxu0
  %v352 = vadd.f32 %v62, %v351
  %v353 = vpop.f32.mrf.mxu0
  %v354 = vpop.f32.mrf.mxu0
  %v355 = vadd.f32 %v62, %v354
  %v356 = vpop.f32.mrf.mxu0
  %357 = vmatprep.mubr.bf16.mxu0 0
  %358 = vmatmul.mubr.bf16.gmra.mxu0 %v203
  %v359 = vpop.f32.mrf.mxu0
  %v360 = vadd.f32 %v62, %v359
  %v361 = vpop.f32.mrf.mxu0
  %v362 = vpop.f32.mrf.mxu0
  %v363 = vadd.f32 %v62, %v362
  %v364 = vpop.f32.mrf.mxu0
  %365 = vdwg.mxu0
  %v366 = vmax.f32 %v240, 0.0
  %v367 = vmax.f32 %v243, 0.0
  %v368 = vmax.f32 %v248, 0.0
  %v369 = vmax.f32 %v251, 0.0
  %v370 = vmax.f32 %v256, 0.0
  %v371 = vmax.f32 %v259, 0.0
  %v372 = vmax.f32 %v264, 0.0
  %v373 = vmax.f32 %v267, 0.0
  %v374 = vmax.f32 %v272, 0.0
  %v375 = vmax.f32 %v275, 0.0
  %v376 = vmax.f32 %v280, 0.0
  %v377 = vmax.f32 %v283, 0.0
  %v378 = vmax.f32 %v288, 0.0
  %v379 = vmax.f32 %v291, 0.0
  %v380 = vmax.f32 %v296, 0.0
  %v381 = vmax.f32 %v299, 0.0
  %v382 = vmax.f32 %v304, 0.0
  %v383 = vmax.f32 %v307, 0.0
  %v384 = vmax.f32 %v312, 0.0
  %v385 = vmax.f32 %v315, 0.0
  %v386 = vmax.f32 %v320, 0.0
  %v387 = vmax.f32 %v323, 0.0
  %v388 = vmax.f32 %v328, 0.0
  %v389 = vmax.f32 %v331, 0.0
  %v390 = vmax.f32 %v336, 0.0
  %v391 = vmax.f32 %v339, 0.0
  %v392 = vmax.f32 %v344, 0.0
  %v393 = vmax.f32 %v347, 0.0
  %v394 = vmax.f32 %v352, 0.0
  %v395 = vmax.f32 %v355, 0.0
  %v396 = vmax.f32 %v360, 0.0
  %v397 = vmax.f32 %v363, 0.0
  %v398 = vpack.c.bf16 %v367, %v366
  %v399 = vpack.c.bf16 %v369, %v368
  %v400 = vpack.c.bf16 %v371, %v370
  %v401 = vpack.c.bf16 %v373, %v372
  %v402 = vpack.c.bf16 %v375, %v374
  %v403 = vpack.c.bf16 %v377, %v376
  %v404 = vpack.c.bf16 %v379, %v378
  %v405 = vpack.c.bf16 %v381, %v380
  %v406 = vpack.c.bf16 %v383, %v382
  %v407 = vpack.c.bf16 %v385, %v384
  %v408 = vpack.c.bf16 %v387, %v386
  %v409 = vpack.c.bf16 %v389, %v388
  %v410 = vpack.c.bf16 %v391, %v390
  %v411 = vpack.c.bf16 %v393, %v392
  %v412 = vpack.c.bf16 %v395, %v394
  %v413 = vpack.c.bf16 %v397, %v396
  %v414 = vld [vmem:[%s3] sm:$0xf]
  %v415 = vld [vmem:[%s3 + $0x4] sm:$0xf]
  %v416 = vld [vmem:[%s3 + $0x8] sm:$0xf]
  %v417 = vld [vmem:[%s3 + $0xc] sm:$0xf]
  %v418 = vld [vmem:[%s3 + $0x10] sm:$0xf]
  %v419 = vld [vmem:[%s3 + $0x14] sm:$0xf]
  %v420 = vld [vmem:[%s3 + $0x18] sm:$0xf]
  %v421 = vld [vmem:[%s3 + $0x1c] sm:$0xf]
  %v422 = vld [vmem:[%s3 + $0x20] sm:$0xf]
  %v423 = vld [vmem:[%s3 + $0x24] sm:$0xf]
  %v424 = vld [vmem:[%s3 + $0x28] sm:$0xf]
  %v425 = vld [vmem:[%s3 + $0x2c] sm:$0xf]
  %v426 = vld [vmem:[%s3 + $0x30] sm:$0xf]
  %v427 = vld [vmem:[%s3 + $0x34] sm:$0xf]
  %v428 = vld [vmem:[%s3 + $0x38] sm:$0xf]
  %v429 = vld [vmem:[%s3 + $0x3c] sm:$0xf]
  %v430 = vld [vmem:[%s4] sm:$0x1]
  %v432 = vlaneseq
  %v433 = vshrl.u32 %v432, 7
  %v434 = vsub.s32 0, %v433
  %v435 = vrot.slane %v430, %v434
  %v453 = vunpack.c.l.b16 %v414
  %v454 = vunpack.c.l.b16 %v415
  %v455 = vunpack.c.l.b16 %v416
  %v456 = vunpack.c.l.b16 %v417
  %v457 = vunpack.c.l.b16 %v418
  %v458 = vunpack.c.l.b16 %v419
  %v459 = vunpack.c.l.b16 %v420
  %v460 = vunpack.c.l.b16 %v421
  %v461 = vunpack.c.l.b16 %v422
  %v462 = vunpack.c.l.b16 %v423
  %v463 = vunpack.c.l.b16 %v424
  %v464 = vunpack.c.l.b16 %v425
  %v465 = vunpack.c.l.b16 %v426
  %v466 = vunpack.c.l.b16 %v427
  %v467 = vunpack.c.l.b16 %v428
  %v468 = vunpack.c.l.b16 %v429
  %v469 = vpack.c.b16 %v454, %v453
  %v470 = vpack.c.b16 %v456, %v455
  %v471 = vpack.c.b16 %v458, %v457
  %v472 = vpack.c.b16 %v460, %v459
  %v473 = vpack.c.b16 %v462, %v461
  %v474 = vpack.c.b16 %v464, %v463
  %v475 = vpack.c.b16 %v466, %v465
  %v476 = vpack.c.b16 %v468, %v467
  %485 = vmatprep.subr.bf16.mxu0 0
  %486 = vmatpush1.bf16.msra.mxu0 %v476
  %487 = vmatprep.subr.bf16.mxu0 0
  %488 = vmatpush1.bf16.msra.mxu0 %v475
  %489 = vmatprep.subr.bf16.mxu0 0
  %490 = vmatpush1.bf16.msra.mxu0 %v474
  %491 = vmatprep.subr.bf16.mxu0 0
  %492 = vmatpush1.bf16.msra.mxu0 %v473
  %493 = vmatprep.subr.bf16.mxu0 0
  %494 = vmatpush1.bf16.msra.mxu0 %v472
  %495 = vmatprep.subr.bf16.mxu0 0
  %496 = vmatpush1.bf16.msra.mxu0 %v471
  %497 = vmatprep.subr.bf16.mxu0 0
  %498 = vmatpush1.bf16.msra.mxu0 %v470
  %499 = vmatprep.subr.bf16.mxu0 0
  %500 = vmatpush1.bf16.msra.mxu0 %v469
  %501 = vmatprep.subr.bf16.mxu0 0
  %502 = vmatpush2.bf16.msra.mxu0 0
  %503 = vmatprep.subr.bf16.mxu0 0
  %504 = vmatpush2.bf16.msra.mxu0 0
  %505 = vmatprep.subr.bf16.mxu0 0
  %506 = vmatpush2.bf16.msra.mxu0 0
  %507 = vmatprep.subr.bf16.mxu0 0
  %508 = vmatpush2.bf16.msra.mxu0 0
  %509 = vmatprep.subr.bf16.mxu0 0
  %510 = vmatpush2.bf16.msra.mxu0 0
  %511 = vmatprep.subr.bf16.mxu0 0
  %512 = vmatpush2.bf16.msra.mxu0 0
  %513 = vmatprep.subr.bf16.mxu0 0
  %514 = vmatpush2.bf16.msra.mxu0 0
  %515 = vmatprep.subr.bf16.mxu0 0
  %516 = vmatpush2.bf16.msra.mxu0 0
  %517 = vmatprep.mubr.bf16.mxu0 0
  %518 = vmatmul.mubr.bf16.gmra.mxu0 %v398
  %v519 = vpop.f32.mrf.mxu0
  %v520 = vadd.f32 %v435, %v519
  %v521 = vpop.f32.mrf.mxu0
  %v522 = vpop.f32.mrf.mxu0
  %v523 = vadd.f32 %v435, %v522
  %v524 = vpop.f32.mrf.mxu0
  %525 = vmatprep.mubr.bf16.mxu0 0
  %526 = vmatmul.mubr.bf16.gmra.mxu0 %v399
  %v527 = vpop.f32.mrf.mxu0
  %v528 = vadd.f32 %v435, %v527
  %v529 = vpop.f32.mrf.mxu0
  %v530 = vpop.f32.mrf.mxu0
  %v531 = vadd.f32 %v435, %v530
  %v532 = vpop.f32.mrf.mxu0
  %533 = vmatprep.mubr.bf16.mxu0 0
  %534 = vmatmul.mubr.bf16.gmra.mxu0 %v400
  %v535 = vpop.f32.mrf.mxu0
  %v536 = vadd.f32 %v435, %v535
  %v537 = vpop.f32.mrf.mxu0
  %v538 = vpop.f32.mrf.mxu0
  %v539 = vadd.f32 %v435, %v538
  %v540 = vpop.f32.mrf.mxu0
  %541 = vmatprep.mubr.bf16.mxu0 0
  %542 = vmatmul.mubr.bf16.gmra.mxu0 %v401
  %v543 = vpop.f32.mrf.mxu0
  %v544 = vadd.f32 %v435, %v543
  %v545 = vpop.f32.mrf.mxu0
  %v546 = vpop.f32.mrf.mxu0
  %v547 = vadd.f32 %v435, %v546
  %v548 = vpop.f32.mrf.mxu0
  %549 = vmatprep.mubr.bf16.mxu0 0
  %550 = vmatmul.mubr.bf16.gmra.mxu0 %v402
  %v551 = vpop.f32.mrf.mxu0
  %v552 = vadd.f32 %v435, %v551
  %v553 = vpop.f32.mrf.mxu0
  %v554 = vpop.f32.mrf.mxu0
  %v555 = vadd.f32 %v435, %v554
  %v556 = vpop.f32.mrf.mxu0
  %557 = vmatprep.mubr.bf16.mxu0 0
  %558 = vmatmul.mubr.bf16.gmra.mxu0 %v403
  %v559 = vpop.f32.mrf.mxu0
  %v560 = vadd.f32 %v435, %v559
  %v561 = vpop.f32.mrf.mxu0
  %v562 = vpop.f32.mrf.mxu0
  %v563 = vadd.f32 %v435, %v562
  %v564 = vpop.f32.mrf.mxu0
  %565 = vmatprep.mubr.bf16.mxu0 0
  %566 = vmatmul.mubr.bf16.gmra.mxu0 %v404
  %v567 = vpop.f32.mrf.mxu0
  %v568 = vadd.f32 %v435, %v567
  %v569 = vpop.f32.mrf.mxu0
  %v570 = vpop.f32.mrf.mxu0
  %v571 = vadd.f32 %v435, %v570
  %v572 = vpop.f32.mrf.mxu0
  %573 = vmatprep.mubr.bf16.mxu0 0
  %574 = vmatmul.mubr.bf16.gmra.mxu0 %v405
  %v575 = vpop.f32.mrf.mxu0
  %v576 = vadd.f32 %v435, %v575
  %v577 = vpop.f32.mrf.mxu0
  %v578 = vpop.f32.mrf.mxu0
  %v579 = vadd.f32 %v435, %v578
  %v580 = vpop.f32.mrf.mxu0
  %581 = vmatprep.mubr.bf16.mxu0 0
  %582 = vmatmul.mubr.bf16.gmra.mxu0 %v406
  %v583 = vpop.f32.mrf.mxu0
  %v584 = vadd.f32 %v435, %v583
  %v585 = vpop.f32.mrf.mxu0
  %v586 = vpop.f32.mrf.mxu0
  %v587 = vadd.f32 %v435, %v586
  %v588 = vpop.f32.mrf.mxu0
  %589 = vmatprep.mubr.bf16.mxu0 0
  %590 = vmatmul.mubr.bf16.gmra.mxu0 %v407
  %v591 = vpop.f32.mrf.mxu0
  %v592 = vadd.f32 %v435, %v591
  %v593 = vpop.f32.mrf.mxu0
  %v594 = vpop.f32.mrf.mxu0
  %v595 = vadd.f32 %v435, %v594
  %v596 = vpop.f32.mrf.mxu0
  %597 = vmatprep.mubr.bf16.mxu0 0
  %598 = vmatmul.mubr.bf16.gmra.mxu0 %v408
  %v599 = vpop.f32.mrf.mxu0
  %v600 = vadd.f32 %v435, %v599
  %v601 = vpop.f32.mrf.mxu0
  %v602 = vpop.f32.mrf.mxu0
  %v603 = vadd.f32 %v435, %v602
  %v604 = vpop.f32.mrf.mxu0
  %605 = vmatprep.mubr.bf16.mxu0 0
  %606 = vmatmul.mubr.bf16.gmra.mxu0 %v409
  %v607 = vpop.f32.mrf.mxu0
  %v608 = vadd.f32 %v435, %v607
  %v609 = vpop.f32.mrf.mxu0
  %v610 = vpop.f32.mrf.mxu0
  %v611 = vadd.f32 %v435, %v610
  %v612 = vpop.f32.mrf.mxu0
  %613 = vmatprep.mubr.bf16.mxu0 0
  %614 = vmatmul.mubr.bf16.gmra.mxu0 %v410
  %v615 = vpop.f32.mrf.mxu0
  %v616 = vadd.f32 %v435, %v615
  %v617 = vpop.f32.mrf.mxu0
  %v618 = vpop.f32.mrf.mxu0
  %v619 = vadd.f32 %v435, %v618
  %v620 = vpop.f32.mrf.mxu0
  %621 = vmatprep.mubr.bf16.mxu0 0
  %622 = vmatmul.mubr.bf16.gmra.mxu0 %v411
  %v623 = vpop.f32.mrf.mxu0
  %v624 = vadd.f32 %v435, %v623
  %v625 = vpop.f32.mrf.mxu0
  %v626 = vpop.f32.mrf.mxu0
  %v627 = vadd.f32 %v435, %v626
  %v628 = vpop.f32.mrf.mxu0
  %629 = vmatprep.mubr.bf16.mxu0 0
  %630 = vmatmul.mubr.bf16.gmra.mxu0 %v412
  %v631 = vpop.f32.mrf.mxu0
  %v632 = vadd.f32 %v435, %v631
  %v633 = vpop.f32.mrf.mxu0
  %v634 = vpop.f32.mrf.mxu0
  %v635 = vadd.f32 %v435, %v634
  %v636 = vpop.f32.mrf.mxu0
  %637 = vmatprep.mubr.bf16.mxu0 0
  %638 = vmatmul.mubr.bf16.gmra.mxu0 %v413
  %v639 = vpop.f32.mrf.mxu0
  %v640 = vadd.f32 %v435, %v639
  %v641 = vpop.f32.mrf.mxu0
  %v642 = vpop.f32.mrf.mxu0
  %v643 = vadd.f32 %v435, %v642
  %v644 = vpop.f32.mrf.mxu0
  %645 = vdwg.mxu0
  %646 = vmax.xlane.f32.xlu0 %v520
  %v647 = vpop.xlane.xlu0 %646
  %648 = vmax.xlane.f32.xlu0 %v523
  %v649 = vpop.xlane.xlu0 %648
  %650 = vmax.xlane.f32.xlu0 %v528
  %v651 = vpop.xlane.xlu0 %650
  %652 = vmax.xlane.f32.xlu0 %v531
  %v653 = vpop.xlane.xlu0 %652
  %654 = vmax.xlane.f32.xlu0 %v536
  %v655 = vpop.xlane.xlu0 %654
  %656 = vmax.xlane.f32.xlu0 %v539
  %v657 = vpop.xlane.xlu0 %656
  %658 = vmax.xlane.f32.xlu0 %v544
  %v659 = vpop.xlane.xlu0 %658
  %660 = vmax.xlane.f32.xlu0 %v547
  %v661 = vpop.xlane.xlu0 %660
  %662 = vmax.xlane.f32.xlu0 %v552
  %v663 = vpop.xlane.xlu0 %662
  %664 = vmax.xlane.f32.xlu0 %v555
  %v665 = vpop.xlane.xlu0 %664
  %666 = vmax.xlane.f32.xlu0 %v560
  %v667 = vpop.xlane.xlu0 %666
  %668 = vmax.xlane.f32.xlu0 %v563
  %v669 = vpop.xlane.xlu0 %668
  %670 = vmax.xlane.f32.xlu0 %v568
  %v671 = vpop.xlane.xlu0 %670
  %672 = vmax.xlane.f32.xlu0 %v571
  %v673 = vpop.xlane.xlu0 %672
  %674 = vmax.xlane.f32.xlu0 %v576
  %v675 = vpop.xlane.xlu0 %674
  %676 = vmax.xlane.f32.xlu0 %v579
  %v677 = vpop.xlane.xlu0 %676
  %678 = vmax.xlane.f32.xlu0 %v584
  %v679 = vpop.xlane.xlu0 %678
  %680 = vmax.xlane.f32.xlu0 %v587
  %v681 = vpop.xlane.xlu0 %680
  %682 = vmax.xlane.f32.xlu0 %v592
  %v683 = vpop.xlane.xlu0 %682
  %684 = vmax.xlane.f32.xlu0 %v595
  %v685 = vpop.xlane.xlu0 %684
  %686 = vmax.xlane.f32.xlu0 %v600
  %v687 = vpop.xlane.xlu0 %686
  %688 = vmax.xlane.f32.xlu0 %v603
  %v689 = vpop.xlane.xlu0 %688
  %690 = vmax.xlane.f32.xlu0 %v608
  %v691 = vpop.xlane.xlu0 %690
  %692 = vmax.xlane.f32.xlu0 %v611
  %v693 = vpop.xlane.xlu0 %692
  %694 = vmax.xlane.f32.xlu0 %v616
  %v695 = vpop.xlane.xlu0 %694
  %696 = vmax.xlane.f32.xlu0 %v619
  %v697 = vpop.xlane.xlu0 %696
  %698 = vmax.xlane.f32.xlu0 %v624
  %v699 = vpop.xlane.xlu0 %698
  %700 = vmax.xlane.f32.xlu0 %v627
  %v701 = vpop.xlane.xlu0 %700
  %702 = vmax.xlane.f32.xlu0 %v632
  %v703 = vpop.xlane.xlu0 %702
  %704 = vmax.xlane.f32.xlu0 %v635
  %v705 = vpop.xlane.xlu0 %704
  %706 = vmax.xlane.f32.xlu0 %v640
  %v707 = vpop.xlane.xlu0 %706
  %708 = vmax.xlane.f32.xlu0 %v643
  %v709 = vpop.xlane.xlu0 %708
  %v710 = vsub.f32 %v520, %v647
  %v711 = vsub.f32 %v523, %v649
  %v712 = vsub.f32 %v528, %v651
  %v713 = vsub.f32 %v531, %v653
  %v714 = vsub.f32 %v536, %v655
  %v715 = vsub.f32 %v539, %v657
  %v716 = vsub.f32 %v544, %v659
  %v717 = vsub.f32 %v547, %v661
  %v718 = vsub.f32 %v552, %v663
  %v719 = vsub.f32 %v555, %v665
  %v720 = vsub.f32 %v560, %v667
  %v721 = vsub.f32 %v563, %v669
  %v722 = vsub.f32 %v568, %v671
  %v723 = vsub.f32 %v571, %v673
  %v724 = vsub.f32 %v576, %v675
  %v725 = vsub.f32 %v579, %v677
  %v726 = vsub.f32 %v584, %v679
  %v727 = vsub.f32 %v587, %v681
  %v728 = vsub.f32 %v592, %v683
  %v729 = vsub.f32 %v595, %v685
  %v730 = vsub.f32 %v600, %v687
  %v731 = vsub.f32 %v603, %v689
  %v732 = vsub.f32 %v608, %v691
  %v733 = vsub.f32 %v611, %v693
  %v734 = vsub.f32 %v616, %v695
  %v735 = vsub.f32 %v619, %v697
  %v736 = vsub.f32 %v624, %v699
  %v737 = vsub.f32 %v627, %v701
  %v738 = vsub.f32 %v632, %v703
  %v739 = vsub.f32 %v635, %v705
  %v740 = vsub.f32 %v640, %v707
  %v741 = vsub.f32 %v643, %v709
  %v742 = vmul.f32 %v710, 1.442695
  %v743 = vpow.pop %v742
  %v744 = vmul.f32 %v711, 1.442695
  %v745 = vpow.pop %v744
  %v746 = vmul.f32 %v712, 1.442695
  %v747 = vpow.pop %v746
  %v748 = vmul.f32 %v713, 1.442695
  %v749 = vpow.pop %v748
  %v750 = vmul.f32 %v714, 1.442695
  %v751 = vpow.pop %v750
  %v752 = vmul.f32 %v715, 1.442695
  %v753 = vpow.pop %v752
  %v754 = vmul.f32 %v716, 1.442695
  %v755 = vpow.pop %v754
  %v756 = vmul.f32 %v717, 1.442695
  %v757 = vpow.pop %v756
  %v758 = vmul.f32 %v718, 1.442695
  %v759 = vpow.pop %v758
  %v760 = vmul.f32 %v719, 1.442695
  %v761 = vpow.pop %v760
  %v762 = vmul.f32 %v720, 1.442695
  %v763 = vpow.pop %v762
  %v764 = vmul.f32 %v721, 1.442695
  %v765 = vpow.pop %v764
  %v766 = vmul.f32 %v722, 1.442695
  %v767 = vpow.pop %v766
  %v768 = vmul.f32 %v723, 1.442695
  %v769 = vpow.pop %v768
  %v770 = vmul.f32 %v724, 1.442695
  %v771 = vpow.pop %v770
  %v772 = vmul.f32 %v725, 1.442695
  %v773 = vpow.pop %v772
  %v774 = vmul.f32 %v726, 1.442695
  %v775 = vpow.pop %v774
  %v776 = vmul.f32 %v727, 1.442695
  %v777 = vpow.pop %v776
  %v778 = vmul.f32 %v728, 1.442695
  %v779 = vpow.pop %v778
  %v780 = vmul.f32 %v729, 1.442695
  %v781 = vpow.pop %v780
  %v782 = vmul.f32 %v730, 1.442695
  %v783 = vpow.pop %v782
  %v784 = vmul.f32 %v731, 1.442695
  %v785 = vpow.pop %v784
  %v786 = vmul.f32 %v732, 1.442695
  %v787 = vpow.pop %v786
  %v788 = vmul.f32 %v733, 1.442695
  %v789 = vpow.pop %v788
  %v790 = vmul.f32 %v734, 1.442695
  %v791 = vpow.pop %v790
  %v792 = vmul.f32 %v735, 1.442695
  %v793 = vpow.pop %v792
  %v794 = vmul.f32 %v736, 1.442695
  %v795 = vpow.pop %v794
  %v796 = vmul.f32 %v737, 1.442695
  %v797 = vpow.pop %v796
  %v798 = vmul.f32 %v738, 1.442695
  %v799 = vpow.pop %v798
  %v800 = vmul.f32 %v739, 1.442695
  %v801 = vpow.pop %v800
  %v802 = vmul.f32 %v740, 1.442695
  %v803 = vpow.pop %v802
  %v804 = vmul.f32 %v741, 1.442695
  %v805 = vpow.pop %v804
  %806 = vadd.xlane.f32.xlu0 %v743
  %v807 = vpop.xlane.xlu0 %806
  %808 = vadd.xlane.f32.xlu0 %v745
  %v809 = vpop.xlane.xlu0 %808
  %810 = vadd.xlane.f32.xlu0 %v747
  %v811 = vpop.xlane.xlu0 %810
  %812 = vadd.xlane.f32.xlu0 %v749
  %v813 = vpop.xlane.xlu0 %812
  %814 = vadd.xlane.f32.xlu0 %v751
  %v815 = vpop.xlane.xlu0 %814
  %816 = vadd.xlane.f32.xlu0 %v753
  %v817 = vpop.xlane.xlu0 %816
  %818 = vadd.xlane.f32.xlu0 %v755
  %v819 = vpop.xlane.xlu0 %818
  %820 = vadd.xlane.f32.xlu0 %v757
  %v821 = vpop.xlane.xlu0 %820
  %822 = vadd.xlane.f32.xlu0 %v759
  %v823 = vpop.xlane.xlu0 %822
  %824 = vadd.xlane.f32.xlu0 %v761
  %v825 = vpop.xlane.xlu0 %824
  %826 = vadd.xlane.f32.xlu0 %v763
  %v827 = vpop.xlane.xlu0 %826
  %828 = vadd.xlane.f32.xlu0 %v765
  %v829 = vpop.xlane.xlu0 %828
  %830 = vadd.xlane.f32.xlu0 %v767
  %v831 = vpop.xlane.xlu0 %830
  %832 = vadd.xlane.f32.xlu0 %v769
  %v833 = vpop.xlane.xlu0 %832
  %834 = vadd.xlane.f32.xlu0 %v771
  %v835 = vpop.xlane.xlu0 %834
  %836 = vadd.xlane.f32.xlu0 %v773
  %v837 = vpop.xlane.xlu0 %836
  %838 = vadd.xlane.f32.xlu0 %v775
  %v839 = vpop.xlane.xlu0 %838
  %840 = vadd.xlane.f32.xlu0 %v777
  %v841 = vpop.xlane.xlu0 %840
  %842 = vadd.xlane.f32.xlu0 %v779
  %v843 = vpop.xlane.xlu0 %842
  %844 = vadd.xlane.f32.xlu0 %v781
  %v845 = vpop.xlane.xlu0 %844
  %846 = vadd.xlane.f32.xlu0 %v783
  %v847 = vpop.xlane.xlu0 %846
  %848 = vadd.xlane.f32.xlu0 %v785
  %v849 = vpop.xlane.xlu0 %848
  %850 = vadd.xlane.f32.xlu0 %v787
  %v851 = vpop.xlane.xlu0 %850
  %852 = vadd.xlane.f32.xlu0 %v789
  %v853 = vpop.xlane.xlu0 %852
  %854 = vadd.xlane.f32.xlu0 %v791
  %v855 = vpop.xlane.xlu0 %854
  %856 = vadd.xlane.f32.xlu0 %v793
  %v857 = vpop.xlane.xlu0 %856
  %858 = vadd.xlane.f32.xlu0 %v795
  %v859 = vpop.xlane.xlu0 %858
  %860 = vadd.xlane.f32.xlu0 %v797
  %v861 = vpop.xlane.xlu0 %860
  %862 = vadd.xlane.f32.xlu0 %v799
  %v863 = vpop.xlane.xlu0 %862
  %864 = vadd.xlane.f32.xlu0 %v801
  %v865 = vpop.xlane.xlu0 %864
  %866 = vadd.xlane.f32.xlu0 %v803
  %v867 = vpop.xlane.xlu0 %866
  %868 = vadd.xlane.f32.xlu0 %v805
  %v869 = vpop.xlane.xlu0 %868
  %v870 = vrcp.pop %v807
  %v871 = vmul.f32 %v743, %v870
  %v872 = vrcp.pop %v809
  %v873 = vmul.f32 %v745, %v872
  %v874 = vrcp.pop %v811
  %v875 = vmul.f32 %v747, %v874
  %v876 = vrcp.pop %v813
  %v877 = vmul.f32 %v749, %v876
  %v878 = vrcp.pop %v815
  %v879 = vmul.f32 %v751, %v878
  %v880 = vrcp.pop %v817
  %v881 = vmul.f32 %v753, %v880
  %v882 = vrcp.pop %v819
  %v883 = vmul.f32 %v755, %v882
  %v884 = vrcp.pop %v821
  %v885 = vmul.f32 %v757, %v884
  %v886 = vrcp.pop %v823
  %v887 = vmul.f32 %v759, %v886
  %v888 = vrcp.pop %v825
  %v889 = vmul.f32 %v761, %v888
  %v890 = vrcp.pop %v827
  %v891 = vmul.f32 %v763, %v890
  %v892 = vrcp.pop %v829
  %v893 = vmul.f32 %v765, %v892
  %v894 = vrcp.pop %v831
  %v895 = vmul.f32 %v767, %v894
  %v896 = vrcp.pop %v833
  %v897 = vmul.f32 %v769, %v896
  %v898 = vrcp.pop %v835
  %v899 = vmul.f32 %v771, %v898
  %v900 = vrcp.pop %v837
  %v901 = vmul.f32 %v773, %v900
  %v902 = vrcp.pop %v839
  %v903 = vmul.f32 %v775, %v902
  %v904 = vrcp.pop %v841
  %v905 = vmul.f32 %v777, %v904
  %v906 = vrcp.pop %v843
  %v907 = vmul.f32 %v779, %v906
  %v908 = vrcp.pop %v845
  %v909 = vmul.f32 %v781, %v908
  %v910 = vrcp.pop %v847
  %v911 = vmul.f32 %v783, %v910
  %v912 = vrcp.pop %v849
  %v913 = vmul.f32 %v785, %v912
  %v914 = vrcp.pop %v851
  %v915 = vmul.f32 %v787, %v914
  %v916 = vrcp.pop %v853
  %v917 = vmul.f32 %v789, %v916
  %v918 = vrcp.pop %v855
  %v919 = vmul.f32 %v791, %v918
  %v920 = vrcp.pop %v857
  %v921 = vmul.f32 %v793, %v920
  %v922 = vrcp.pop %v859
  %v923 = vmul.f32 %v795, %v922
  %v924 = vrcp.pop %v861
  %v925 = vmul.f32 %v797, %v924
  %v926 = vrcp.pop %v863
  %v927 = vmul.f32 %v799, %v926
  %v928 = vrcp.pop %v865
  %v929 = vmul.f32 %v801, %v928
  %v930 = vrcp.pop %v867
  %v931 = vmul.f32 %v803, %v930
  %v932 = vrcp.pop %v869
  %v933 = vmul.f32 %v805, %v932
  %934 = vst [vmem:[%s5] sm:$0xff] %v871
  %935 = vst [vmem:[%s5 + $0x8] sm:$0xff] %v873
  %936 = vst [vmem:[%s5 + $0x10] sm:$0xff] %v875
  %937 = vst [vmem:[%s5 + $0x18] sm:$0xff] %v877
  %938 = vst [vmem:[%s5 + $0x20] sm:$0xff] %v879
  %939 = vst [vmem:[%s5 + $0x28] sm:$0xff] %v881
  %940 = vst [vmem:[%s5 + $0x30] sm:$0xff] %v883
  %941 = vst [vmem:[%s5 + $0x38] sm:$0xff] %v885
  %942 = vst [vmem:[%s5 + $0x40] sm:$0xff] %v887
  %943 = vst [vmem:[%s5 + $0x48] sm:$0xff] %v889
  %944 = vst [vmem:[%s5 + $0x50] sm:$0xff] %v891
  %945 = vst [vmem:[%s5 + $0x58] sm:$0xff] %v893
  %946 = vst [vmem:[%s5 + $0x60] sm:$0xff] %v895
  %947 = vst [vmem:[%s5 + $0x68] sm:$0xff] %v897
  %948 = vst [vmem:[%s5 + $0x70] sm:$0xff] %v899
  %949 = vst [vmem:[%s5 + $0x78] sm:$0xff] %v901
  %950 = vst [vmem:[%s5 + $0x80] sm:$0xff] %v903
  %951 = vst [vmem:[%s5 + $0x88] sm:$0xff] %v905
  %952 = vst [vmem:[%s5 + $0x90] sm:$0xff] %v907
  %953 = vst [vmem:[%s5 + $0x98] sm:$0xff] %v909
  %954 = vst [vmem:[%s5 + $0xa0] sm:$0xff] %v911
  %955 = vst [vmem:[%s5 + $0xa8] sm:$0xff] %v913
  %956 = vst [vmem:[%s5 + $0xb0] sm:$0xff] %v915
  %957 = vst [vmem:[%s5 + $0xb8] sm:$0xff] %v917
  %958 = vst [vmem:[%s5 + $0xc0] sm:$0xff] %v919
  %959 = vst [vmem:[%s5 + $0xc8] sm:$0xff] %v921
  %960 = vst [vmem:[%s5 + $0xd0] sm:$0xff] %v923
  %961 = vst [vmem:[%s5 + $0xd8] sm:$0xff] %v925
  %962 = vst [vmem:[%s5 + $0xe0] sm:$0xff] %v927
  %963 = vst [vmem:[%s5 + $0xe8] sm:$0xff] %v929
  %964 = vst [vmem:[%s5 + $0xf0] sm:$0xff] %v931
  %965 = vst [vmem:[%s5 + $0xf8] sm:$0xff] %v933
  // Predicated region
  $region22: #{deepnet_forward.1} parent=0 // pred_check
    _
  $region23: #{deepnet_forward.1} parent=0 // pred_check_branch
    %967 = sbr.rel (0) target = $region25
  $region24: #{deepnet_forward.1} parent=0 // pred_region
    _
  $region25: #{deepnet_forward.1} parent=0 // pred_fallthru
    _
  // Predicated region
  $region26: #{deepnet_forward.1} parent=0 // pred_check
    _
  $region27: #{deepnet_forward.1} parent=0 // pred_check_branch
    %969 = sbr.rel (0) target = $region29
  $region28: #{deepnet_forward.1} parent=0 // pred_region
    _
  $region29: #{deepnet_forward.1} parent=0 // pred_fallthru
    _

</llo_original>
